<compile_context>
chip_gen: v7x
topology: tpu7x:2x2x1
jax: 0.10.0
libtpu: 0.0.40
codegen_flags: <defaults>
</compile_context>

<pallas_src>
import functools

import jax
import jax.numpy as jnp
import numpy as np
from jax import lax
from jax.experimental import pallas as pl
from jax.experimental.pallas import tpu as pltpu


_TILE_BUDGET_BYTES = 4 * 1024 * 1024     # target x-block size (review: 2-6 MiB)
_TILE_HARD_CAP_BYTES = 10 * 1024 * 1024  # allow a single whole-C block up to this
_VMEM_CAP_BYTES = 64 * 1024 * 1024       # never request more than v7x physical VMEM


def _sublane_pack(C):
    """Sublane pack factor R (R | C, R <= 8): channels are viewed as (G, R)."""
    for r in (8, 4, 2, 1):
        if C % r == 0:
            return r
    return 1


def _pick_group_tile(G, group_bytes):
    """Channel-groups per x block, sized by a VMEM byte budget."""
    max_gt = max(1, _TILE_BUDGET_BYTES // group_bytes)
    if G <= max_gt:
        return G                                   # whole reduction in one block
    if G <= 2 * max_gt and G * group_bytes <= _TILE_HARD_CAP_BYTES:
        return G                                   # only ~2 tiles anyway: one long DMA
    best = 1
    for d in range(min(max_gt, G), 0, -1):         # largest divisor within budget
        if G % d == 0:
            best = d
            break
    if 2 * best >= max_gt:
        return best                                # good divisor: no tail masking needed
    return max_gt                                  # pathological G: full tile + masked tail


def _vmem_limit(need_bytes):
    return min(_VMEM_CAP_BYTES, max(16 * 1024 * 1024, int(need_bytes * 1.5) + (2 << 20)))


def _reduce_kernel(x_ref, o_ref, sum_ref, max_ref, *, C, G, Gt, has_tail):
    # x_ref   : (1, Gt, R, HW)   one channel-group tile of one sample (lane-dense)
    # o_ref   : (1, 2, HW) f32   [avg | max] maps, resident across the channel axis
    # scratch : sum/max accumulators, (R, HW) f32 (sublane-packed)
    c_step = pl.program_id(1)

    @pl.when(c_step == 0)
    def _():
        sum_ref[...] = jnp.zeros_like(sum_ref)
        max_ref[...] = jnp.full_like(max_ref, -jnp.inf)

    xt = x_ref[0]                                            # (Gt, R, HW)
    if has_tail:                                             # only for pathological C
        gid = c_step * Gt + lax.broadcasted_iota(jnp.int32, (Gt, 1, 1), 0)
        valid = gid < G
        xs = jnp.where(valid, xt, 0).astype(jnp.float32)
        xm = jnp.where(valid, xt, -jnp.inf).astype(jnp.float32)
    else:
        xs = xt.astype(jnp.float32)
        xm = xs

    sum_ref[...] += jnp.sum(xs, axis=0)                      # (R, HW)
    max_ref[...] = jnp.maximum(max_ref[...], jnp.max(xm, axis=0))

    @pl.when(c_step == pl.num_programs(1) - 1)
    def _():
        o_ref[0, 0:1, :] = jnp.sum(sum_ref[...], axis=0, keepdims=True) * (1.0 / C)
        o_ref[0, 1:2, :] = jnp.max(max_ref[...], axis=0, keepdims=True)


def _conv_band(weight, W, K, pad, Wo):
    """Toeplitz band folding the kw axis (and column padding) of the conv.

    band[kh, c, j, wo] = weight[0, c, kh, j - wo + pad]   (0 if out of range)
    so that (P_c[kh:kh+Ho, :] @ band[kh, c])[ho, wo]
          = sum_kw P_c[ho + kh, wo + kw - pad] * weight[0, c, kh, kw],
    where P_c is the row-only zero-padded (Hp, W) reduced map of channel c.
    """
    w = jnp.asarray(weight, jnp.float32)[0]                         # (2, K, K)
    kw = jnp.arange(W)[:, None] - jnp.arange(Wo)[None, :] + pad     # (W, Wo)
    valid = (kw >= 0) & (kw < K)
    gath = w[:, :, jnp.clip(kw, 0, K - 1)]                          # (2, K, W, Wo)
    band = jnp.where(valid[None, None], gath, 0.0)
    return jnp.transpose(band, (1, 0, 2, 3))                        # (K, 2, W, Wo)


def _conv_sigmoid_kernel(band_ref, m_ref, o_ref, pad_ref, *, H, W, K, pad, Ho, Wo):
    # band_ref : (K, 2, W, Wo) f32    conv weights as Toeplitz bands
    # m_ref    : (1, 2, H, W)  f32    [avg, max] maps of one sample
    # o_ref    : (1, 1, Ho, Wo)       attention map
    # pad_ref  : (2, H + 2*pad, W) f32 scratch (row-padded maps)
    Hp = H + 2 * pad
    z = jnp.zeros((pad, W), jnp.float32)
    for c in range(2):
        pad_ref[c, 0:pad, :] = z                  # zero only the halo rows
        pad_ref[c, pad + H:Hp, :] = z
        pad_ref[c, pad:pad + H, :] = m_ref[0, c]  # full-lane-width store, no concat

    acc = jnp.zeros((Ho, Wo), jnp.float32)
    for kh in range(K):                           # 2*K small MXU matmuls, once/sample
        for c in range(2):
            acc = acc + jnp.dot(pad_ref[c, kh:kh + Ho, :], band_ref[kh, c],
                                preferred_element_type=jnp.float32,
                                precision=lax.Precision.HIGHEST)
    o_ref[0, 0] = jax.nn.sigmoid(acc).astype(o_ref.dtype)


def spatial_attention(x, weight, kernel_size=7):
    """x: (N, C, H, W); weight: (1, 2, K, K) Conv2d weight (bias-free)."""
    assert kernel_size in (3, 5, 7), "kernel size must be 3, 5 or 7"
    K = kernel_size
    pad = 3 if K == 7 else 1                      # matches the PyTorch module exactly
    N, C, H, W = x.shape
    Ho = H + 2 * pad - K + 1
    Wo = W + 2 * pad - K + 1
    HW = H * W
    xbytes = jnp.dtype(x.dtype).itemsize

    # ---- pass 1: channel mean/max reduction, lane-dense over H*W -------------
    R = _sublane_pack(C)
    G = C // R
    x4 = x.reshape(N, G, R, HW)                   # free reshape of contiguous NCHW
    group_bytes = R * HW * xbytes
    Gt = _pick_group_tile(G, group_bytes)
    has_tail = (G % Gt) != 0
    c_steps = pl.cdiv(G, Gt)

    need_a = (2 * Gt * group_bytes                # double-buffered x tile
              + 2 * 2 * HW * 4                    # double-buffered [avg|max] output
              + 2 * R * HW * 4)                   # sum/max accumulators
    maps = pl.pallas_call(
        functools.partial(_reduce_kernel, C=C, G=G, Gt=Gt, has_tail=has_tail),
        out_shape=jax.ShapeDtypeStruct((N, 2, HW), jnp.float32),
        grid_spec=pltpu.PrefetchScalarGridSpec(
            num_scalar_prefetch=0,
            grid=(N, c_steps),                    # reduction (channel) axis last
            in_specs=[pl.BlockSpec((1, Gt, R, HW), lambda n, c: (n, c, 0, 0))],
            out_specs=pl.BlockSpec((1, 2, HW), lambda n, c: (n, 0, 0)),
            scratch_shapes=[pltpu.VMEM((R, HW), jnp.float32),
                            pltpu.VMEM((R, HW), jnp.float32)],
        ),
        compiler_params=pltpu.CompilerParams(
            dimension_semantics=("parallel", "arbitrary"),
            vmem_limit_bytes=_vmem_limit(need_a)),
    )(x4)

    # ---- pass 2: KxK conv (2*K band matmuls) + sigmoid, once per sample ------
    band = _conv_band(weight, W, K, pad, Wo)      # (K, 2, W, Wo)
    maps2d = maps.reshape(N, 2, H, W)             # free reshape

    need_b = (2 * K * 2 * W * Wo * 4 + 2 * 2 * H * W * 4
              + 2 * Ho * Wo * xbytes + 2 * (H + 2 * pad) * W * 4)
    return pl.pallas_call(
        functools.partial(_conv_sigmoid_kernel, H=H, W=W, K=K, pad=pad, Ho=Ho, Wo=Wo),
        out_shape=jax.ShapeDtypeStruct((N, 1, Ho, Wo), x.dtype),
        grid_spec=pltpu.PrefetchScalarGridSpec(
            num_scalar_prefetch=0,
            grid=(N,),
            in_specs=[pl.BlockSpec((K, 2, W, Wo), lambda n: (0, 0, 0, 0)),
                      pl.BlockSpec((1, 2, H, W), lambda n: (n, 0, 0, 0))],
            out_specs=pl.BlockSpec((1, 1, Ho, Wo), lambda n: (n, 0, 0, 0)),
            scratch_shapes=[pltpu.VMEM((2, H + 2 * pad, W), jnp.float32)],
        ),
        compiler_params=pltpu.CompilerParams(
            dimension_semantics=("parallel",),
            vmem_limit_bytes=_vmem_limit(need_b)),
    )(band, maps2d)


def _reference(x, weight, kernel_size=7):
    pad = 3 if kernel_size == 7 else 1
    avg = jnp.mean(x, axis=1, keepdims=True)
    mx = jnp.max(x, axis=1, keepdims=True)
    cat = jnp.concatenate([avg, mx], axis=1)
    y = lax.conv_general_dilated(
        cat, jnp.asarray(weight, cat.dtype), window_strides=(1, 1),
        padding=[(pad, pad), (pad, pad)],
        dimension_numbers=("NCHW", "OIHW", "NCHW"),
        precision=lax.Precision.HIGHEST)
    return jax.nn.sigmoid(y)


if __name__ == "__main__":
    key = jax.random.PRNGKey(0)
    kx, kw_key = jax.random.split(key)

    N, C, H, W = 2, 4, 16, 16
    K = 7
    x = jax.random.normal(kx, (N, C, H, W), dtype=jnp.float32)
    # Deterministic Conv2d(2, 1, 7, bias=False)-style weight (synthetic).
    fan_in = 2 * K * K
    bound = 1.0 / np.sqrt(fan_in)
    weight = jax.random.uniform(kw_key, (1, 2, K, K), jnp.float32, -bound, bound)

    out = jax.block_until_ready(spatial_attention(x, weight, kernel_size=K))

    ref = _reference(x, weight, kernel_size=K)
    assert out.shape == (N, 1, H, W)
    np.testing.assert_allclose(np.asarray(out), np.asarray(ref),
                               rtol=2e-4, atol=2e-5)
    print("KERNEL_OK")
</pallas_src>

<mosaic_0001>
module attributes {stable_mosaic.version = 11 : i64} {
  func.func @_reduce_kernel(%arg0: i32, %arg1: i32, %arg2: memref<1x1x4x256xf32, #tpu.memory_space<vmem>>, %arg3: memref<1x2x256xf32, #tpu.memory_space<vmem>>, %arg4: memref<4x256xf32, #tpu.memory_space<vmem>>, %arg5: memref<4x256xf32, #tpu.memory_space<vmem>>) attributes {dimension_semantics = [#tpu.dimension_semantics<parallel>, #tpu.dimension_semantics<arbitrary>], iteration_bounds = array<i64: 2, 1>, scalar_prefetch = 0 : i64, scratch_operands = 2 : i64, tpu.core_type = #tpu.core_type<tc>, window_params = [{transform_indices = @transform_0, window_bounds = array<i64: 1, 1, 4, 256>}, {transform_indices = @transform_1, window_bounds = array<i64: 1, 2, 256>}]} {
    %c0_i32 = arith.constant 0 : i32
    %0 = arith.cmpi eq, %arg1, %c0_i32 : i32
    %1 = arith.extui %0 : i1 to i32
    %c0_i32_0 = arith.constant 0 : i32
    %2 = arith.cmpi ne, %1, %c0_i32_0 : i32
    scf.if %2 {
      %cst_15 = arith.constant 0.000000e+00 : f32
      %16 = vector.broadcast %cst_15 : f32 to vector<4x256xf32>
      %c0_16 = arith.constant 0 : index
      %c0_17 = arith.constant 0 : index
      %17 = vector.load %arg4[%c0_16, %c0_17] : memref<4x256xf32, #tpu.memory_space<vmem>>, vector<4x256xf32>
      tpu.vector_store %arg4[%c0_16, %c0_17], %16 {strides = array<i32>} : memref<4x256xf32, #tpu.memory_space<vmem>>, vector<4x256xf32>,
      %cst_18 = arith.constant 0xFF800000 : f32
      %18 = vector.broadcast %cst_18 : f32 to vector<4x256xf32>
      %c0_19 = arith.constant 0 : index
      %c0_20 = arith.constant 0 : index
      %19 = vector.load %arg5[%c0_19, %c0_20] : memref<4x256xf32, #tpu.memory_space<vmem>>, vector<4x256xf32>
      tpu.vector_store %arg5[%c0_19, %c0_20], %18 {strides = array<i32>} : memref<4x256xf32, #tpu.memory_space<vmem>>, vector<4x256xf32>,
    } else {
    }
    %c0 = arith.constant 0 : index
    %c0_1 = arith.constant 0 : index
    %c0_2 = arith.constant 0 : index
    %c0_3 = arith.constant 0 : index
    %3 = vector.load %arg2[%c0, %c0_1, %c0_2, %c0_3] : memref<1x1x4x256xf32, #tpu.memory_space<vmem>>, vector<1x1x4x256xf32>
    %4 = vector.shape_cast %3 : vector<1x1x4x256xf32> to vector<1x4x256xf32>
    %c0_4 = arith.constant 0 : index
    %c0_5 = arith.constant 0 : index
    %5 = vector.load %arg4[%c0_4, %c0_5] : memref<4x256xf32, #tpu.memory_space<vmem>>, vector<4x256xf32>
    %cst = arith.constant dense<0.000000e+00> : vector<4x256xf32>
    %6 = vector.multi_reduction <add>, %4, %cst [0] : vector<1x4x256xf32> to vector<4x256xf32>
    %7 = arith.addf %5, %6 : vector<4x256xf32>
    %c0_6 = arith.constant 0 : index
    %c0_7 = arith.constant 0 : index
    %8 = vector.load %arg4[%c0_6, %c0_7] : memref<4x256xf32, #tpu.memory_space<vmem>>, vector<4x256xf32>
    tpu.vector_store %arg4[%c0_6, %c0_7], %7 {strides = array<i32>} : memref<4x256xf32, #tpu.memory_space<vmem>>, vector<4x256xf32>,
    %c0_8 = arith.constant 0 : index
    %c0_9 = arith.constant 0 : index
    %9 = vector.load %arg5[%c0_8, %c0_9] : memref<4x256xf32, #tpu.memory_space<vmem>>, vector<4x256xf32>
    %cst_10 = arith.constant dense<0xFF800000> : vector<4x256xf32>
    %10 = vector.multi_reduction <maximumf>, %4, %cst_10 [0] : vector<1x4x256xf32> to vector<4x256xf32>
    %11 = arith.maximumf %9, %10 : vector<4x256xf32>
    %c0_11 = arith.constant 0 : index
    %c0_12 = arith.constant 0 : index
    %12 = vector.load %arg5[%c0_11, %c0_12] : memref<4x256xf32, #tpu.memory_space<vmem>>, vector<4x256xf32>
    tpu.vector_store %arg5[%c0_11, %c0_12], %11 {strides = array<i32>} : memref<4x256xf32, #tpu.memory_space<vmem>>, vector<4x256xf32>,
    %c0_i32_13 = arith.constant 0 : i32
    %13 = arith.cmpi eq, %arg1, %c0_i32_13 : i32
    %14 = arith.extui %13 : i1 to i32
    %c0_i32_14 = arith.constant 0 : i32
    %15 = arith.cmpi ne, %14, %c0_i32_14 : i32
    scf.if %15 {
      %c0_15 = arith.constant 0 : index
      %c0_16 = arith.constant 0 : index
      %16 = vector.load %arg4[%c0_15, %c0_16] : memref<4x256xf32, #tpu.memory_space<vmem>>, vector<4x256xf32>
      %cst_17 = arith.constant dense<0.000000e+00> : vector<256xf32>
      %17 = vector.multi_reduction <add>, %16, %cst_17 [0] : vector<4x256xf32> to vector<256xf32>
      %18 = vector.shape_cast %17 : vector<256xf32> to vector<1x256xf32>
      %cst_18 = arith.constant 2.500000e-01 : f32
      %19 = vector.broadcast %cst_18 : f32 to vector<1x256xf32>
      %20 = arith.mulf %18, %19 : vector<1x256xf32>
      %c0_19 = arith.constant 0 : index
      %c0_20 = arith.constant 0 : index
      %c0_21 = arith.constant 0 : index
      %21 = vector.load %arg3[%c0_19, %c0_20, %c0_21] : memref<1x2x256xf32, #tpu.memory_space<vmem>>, vector<1x1x256xf32>
      %22 = vector.shape_cast %21 : vector<1x1x256xf32> to vector<1x256xf32>
      %23 = vector.shape_cast %20 : vector<1x256xf32> to vector<1x1x256xf32>
      tpu.vector_store %arg3[%c0_19, %c0_20, %c0_21], %23 {strides = array<i32>} : memref<1x2x256xf32, #tpu.memory_space<vmem>>, vector<1x1x256xf32>,
      %c0_22 = arith.constant 0 : index
      %c0_23 = arith.constant 0 : index
      %24 = vector.load %arg5[%c0_22, %c0_23] : memref<4x256xf32, #tpu.memory_space<vmem>>, vector<4x256xf32>
      %cst_24 = arith.constant dense<0xFF800000> : vector<256xf32>
      %25 = vector.multi_reduction <maximumf>, %24, %cst_24 [0] : vector<4x256xf32> to vector<256xf32>
      %26 = vector.shape_cast %25 : vector<256xf32> to vector<1x256xf32>
      %c0_25 = arith.constant 0 : index
      %c1 = arith.constant 1 : index
      %c0_26 = arith.constant 0 : index
      %27 = vector.load %arg3[%c0_25, %c1, %c0_26] : memref<1x2x256xf32, #tpu.memory_space<vmem>>, vector<1x1x256xf32>
      %28 = vector.shape_cast %27 : vector<1x1x256xf32> to vector<1x256xf32>
      %29 = vector.shape_cast %26 : vector<1x256xf32> to vector<1x1x256xf32>
      tpu.vector_store %arg3[%c0_25, %c1, %c0_26], %29 {strides = array<i32>} : memref<1x2x256xf32, #tpu.memory_space<vmem>>, vector<1x1x256xf32>,
    } else {
    }
    return
  }
  func.func @transform_0(%arg0: i32, %arg1: i32) -> (i32, i32, i32, i32) {
    %c0_i32 = arith.constant 0 : i32
    %c0_i32_0 = arith.constant 0 : i32
    %c0_i32_1 = arith.constant 0 : i32
    return %arg0, %arg1, %c0_i32, %c0_i32_0 : i32, i32, i32, i32
  }
  func.func @transform_1(%arg0: i32, %arg1: i32) -> (i32, i32, i32) {
    %c0_i32 = arith.constant 0 : i32
    %c0_i32_0 = arith.constant 0 : i32
    %c0_i32_1 = arith.constant 0 : i32
    return %arg0, %c0_i32, %c0_i32_0 : i32, i32, i32
  }
}

</mosaic_0001>

<llo_original>
// kernel: tpu_custom_call.1
$region0: #{tpu_custom_call.1}
  #allocation0 [shape = 'u32[]', space=smem, size = 0x4, offset = 0x4, fixed_abs, tag = 'smem constant byte address 0x4 - core index']
  #allocation1 [shape = 'u32[144,128]{1,0:T(1,128)}', space=vmem, size = 0x12000, scoped, tag = 'internal scratch']
  #allocation2 [shape = 'f32[4,256]{1,0:T(4,128)}', space=vmem, size = 0x1000, scoped, tag = 'scratch operand']
  #allocation3 [shape = 'f32[4,256]{1,0:T(4,128)}', space=vmem, size = 0x1000, scoped, tag = 'scratch operand']
  %s0 = inlined_call_operand.hbm [shape: f32[2,1,4,256], index: 0, kind: input, shape index: {}]
  %s1 = inlined_call_operand.hbm [shape: f32[2,2,256], index: 1, kind: output, shape index: {}]
  %s2 = sld [smem:[#allocation0]]
  $region49: #{tpu_custom_call.1} parent=0
    _
  %s4 = ssub.s32 1, %s2
  %s5 = scalar_select 0, %s4, %s2
  $region1: #{tpu_custom_call.1} parent=0
    #allocation4 [shape = 'u8[8192]{0}', space=vmem, size = 0x2000, scoped, tag = 'input window, operand 0']
    #allocation5 [shape = 's32[2]{0}', space=sflag, size = 0x8, scoped, tag = 'scoped memory for tpu_custom_call.1']
    #allocation6 [shape = 's32[2]{0}', space=sflag, size = 0x8, scoped, tag = 'scoped memory for tpu_custom_call.1']
    #allocation7 [shape = 'u8[4096]{0}', space=vmem, size = 0x1000, scoped, tag = 'output window, operand 0']
    %6 = vsyncpa [#allocation5], 0
    %s7 = scalar_lea.sflag [#allocation5], 1
    %8 = vsyncpa %s7, 0
    %9 = vsyncpa [#allocation6], 0
    %s10 = scalar_lea.sflag [#allocation6], 1
    %11 = vsyncpa %s10, 0
    loop: start=0, step=1, limit=4
    $region2: #{tpu_custom_call.1} parent=1 // loop_pre_header
      _
    $region3: #{tpu_custom_call.1} parent=1 // loop_header
      %s13 = sphi 0, %s17
      %p14 = scmp.ge.s32.totalorder %s13, 4
      %s20 = sphi 0, %s32
      %s21 = sphi 0, %s28
      %s22 = sphi 0, %s20
      %s23 = sphi 0, %s21
      %s24 = sphi 0, %s22
      %s25 = sphi 0, %s23
      %s37 = sphi 0, %s39
      %s40 = sphi 0, %s37
      %s41 = sphi 0, %s40
      %s57 = sphi 0, %s41
      %s63 = sphi 0, %s65
      %s66 = sphi 0, %s63
      %s67 = sphi 0, %s66
      %s83 = sphi 0, %s67
    $region4: #{tpu_custom_call.1} parent=1 // loop_header_branch
      %16 = sbr.rel (%p14) target = $region8
    $region5: #{tpu_custom_call.1} parent=1 // loop_body
      %s18 = ssub.s32 %s13, 1
      %s19 = ssub.s32 %s13, 2
      %s26 = sadd.s32 1, %s21
      %p27 = scmp.ge.s32.totalorder %s26, 1
      %s28 = scalar_select %p27, 0, %s26
      %s29 = sadd.s32 1, %s20
      %s30 = scalar_select %p27, %s29, %s20
      %p31 = scmp.ge.s32.totalorder %s30, 2
      %s32 = scalar_select %p31, 0, %s30
      %s33 = ssub.s32 %s20, %s32
      %s34 = ssub.s32 %s21, %s28
      %s35 = sor.u32 %s33, %s34
      %p36 = scmp.eq.s32.totalorder %s35, 0
      %s38 = sadd.s32 %s37, 1
      %s39 = scalar_select %p36, %s37, %s38
      %p42 = pneg %p36
      %p43 = scmp.eq.s32.totalorder %s13, 1
      %p44 = por %p42, %p43
      %p45 = scmp.ne.s32.totalorder %s37, %s40
      %p46 = scmp.eq.s32.totalorder %s13, 0
      %p47 = por %p45, %p46
      %p48 = scmp.ne.s32.totalorder %s37, %s40
      %p49 = scmp.eq.s32.totalorder %s18, 1
      %p50 = por %p48, %p49
      %p51 = scmp.ne.s32.totalorder %s40, %s41
      %p52 = scmp.eq.s32.totalorder %s18, 0
      %p53 = por %p51, %p52
      %p54 = scmp.ne.s32.totalorder %s40, %s41
      %p55 = scmp.eq.s32.totalorder %s19, 1
      %p56 = por %p54, %p55
      %p58 = scmp.ne.s32.totalorder %s41, %s57
      %p59 = scmp.eq.s32.totalorder %s19, 0
      %p60 = por %p58, %p59
      %s61 = ssub.s32 %s20, %s32
      %p62 = scmp.eq.s32.totalorder %s61, 0
      %s64 = sadd.s32 %s63, 1
      %s65 = scalar_select %p62, %s63, %s64
      %p68 = pneg %p62
      %p69 = scmp.eq.s32.totalorder %s13, 1
      %p70 = por %p68, %p69
      %p71 = scmp.ne.s32.totalorder %s63, %s66
      %p72 = scmp.eq.s32.totalorder %s13, 0
      %p73 = por %p71, %p72
      %p74 = scmp.ne.s32.totalorder %s63, %s66
      %p75 = scmp.eq.s32.totalorder %s18, 1
      %p76 = por %p74, %p75
      %p77 = scmp.ne.s32.totalorder %s66, %s67
      %p78 = scmp.eq.s32.totalorder %s18, 0
      %p79 = por %p77, %p78
      %p80 = scmp.ne.s32.totalorder %s66, %s67
      %p81 = scmp.eq.s32.totalorder %s19, 1
      %p82 = por %p80, %p81
      %p84 = scmp.ne.s32.totalorder %s67, %s83
      %p85 = scmp.eq.s32.totalorder %s19, 0
      %p86 = por %p84, %p85
      %p87 = scmp.le.s32.totalorder 1, %s13
      %p88 = scmp.lt.s32.totalorder %s13, 3
      %p89 = pnand %p87, %p88
      %p90 = pneg %p89
      // Predicated region
      $region9: #{tpu_custom_call.1} parent=5 // pred_check
        _
      $region10: #{tpu_custom_call.1} parent=5 // pred_check_branch
        %92 = sbr.rel (%p89) target = $region12
      $region11: #{tpu_custom_call.1} parent=5 // pred_region
        %s93 = ssub.s32 %s13, 1
      $region12: #{tpu_custom_call.1} parent=5 // pred_fallthru
        _
      %p94 = scmp.lt.s32.totalorder %s13, 2
      // Predicated region
      $region13: #{tpu_custom_call.1} parent=5 // pred_check
        %p95 = pneg %p94
      $region14: #{tpu_custom_call.1} parent=5 // pred_check_branch
        %97 = sbr.rel (%p95) target = $region16
      $region15: #{tpu_custom_call.1} parent=5 // pred_region
        // Predicated region
        $region17: #{tpu_custom_call.1} parent=15 // pred_check
          %p98 = pneg %p47
        $region18: #{tpu_custom_call.1} parent=15 // pred_check_branch
          %100 = sbr.rel (%p98) target = $region20
        $region19: #{tpu_custom_call.1} parent=15 // pred_region
          %s101 = sand.u32 %s37, 1
          %s102 = scalar_lea.sflag [#allocation5], %s101
          %s103 = sand.u32 %s37, 1
          %s104 = smul.addr %s103, 8
          %s105 = scalar_lea.vmem [#allocation4], %s104
          %s107 = ssub.s32 128, 128
          %108 = vsyncadd %s102, %s107
          %s109 = smul.addr %s21, 2
          %s110 = smul.addr %s20, 2
          %s111 = sadd.s32 %s109, %s110
          %s112 = smul.addr %s111, 64
          %s113 = scalar_lea.hbm %s0, %s112
          %s115 = sshll.u32 %s105, 4
          %s116 = int_to_ptr.vmem [resolvable:$true] %s115
          %118 = dma.hbm_to_vmem [thread:$0]  %s113, 128, %s116, %s102
        $region20: #{tpu_custom_call.1} parent=15 // pred_fallthru
          _
      $region16: #{tpu_custom_call.1} parent=5 // pred_fallthru
        _
      %p119 = scmp.le.s32.totalorder 1, %s13
      %p120 = scmp.lt.s32.totalorder %s13, 3
      %p121 = pnand %p119, %p120
      %p122 = pneg %p121
      // Predicated region
      $region21: #{tpu_custom_call.1} parent=5 // pred_check
        _
      $region22: #{tpu_custom_call.1} parent=5 // pred_check_branch
        %124 = sbr.rel (%p121) target = $region24
      $region23: #{tpu_custom_call.1} parent=5 // pred_region
        %s125 = ssub.s32 %s13, 1
        %s126 = sand.u32 %s40, 1
        %s127 = scalar_lea.sflag [#allocation5], %s126
        %s128 = sand.u32 %s40, 1
        %s129 = smul.addr %s128, 8
        %s130 = scalar_lea.vmem [#allocation4], %s129
        // Predicated region
        $region25: #{tpu_custom_call.1} parent=23 // pred_check
          %p131 = pneg %p53
        $region26: #{tpu_custom_call.1} parent=23 // pred_check_branch
          %133 = sbr.rel (%p131) target = $region28
        $region27: #{tpu_custom_call.1} parent=23 // pred_region
          %134 = dma.done %s127, 128
        $region28: #{tpu_custom_call.1} parent=23 // pred_fallthru
          _
        %s135 = sand.u32 %s40, 1
        %s136 = scalar_lea.sflag [#allocation5], %s135
        %s137 = sand.u32 %s40, 1
        %s138 = smul.addr %s137, 8
        %s139 = scalar_lea.vmem [#allocation4], %s138
        %p140 = pneg %p53
        %p141 = pneg %p50
        %p142 = pneg %p79
        %p143 = pneg %p76
        %s144 = sand.u32 %s66, 1
        %s145 = scalar_lea.sflag [#allocation6], %s144
        %s146 = sand.u32 %s66, 1
        %s147 = smul.addr %s146, 4
        %s148 = scalar_lea.vmem [#allocation7], %s147
        %p149 = scmp.eq.s32.totalorder %s23, 0
        // Predicated region
        $region29: #{tpu_custom_call.1} parent=23 // pred_check
          %p150 = pneg %p149
        $region30: #{tpu_custom_call.1} parent=23 // pred_check_branch
          %152 = sbr.rel (%p150) target = $region32
        $region31: #{tpu_custom_call.1} parent=23 // pred_region
          %153 = vst [vmem:[#allocation2] sm:$0xff] 0.0
          %154 = vst [vmem:[#allocation3] sm:$0xff] -inf
        $region32: #{tpu_custom_call.1} parent=23 // pred_fallthru
          _
        %v155 = vld [vmem:[%s130] sm:$0xff]
        %v156 = vld [vmem:[#allocation2] sm:$0xff]
        %v157 = vadd.f32 %v155, 0.0
        %v158 = vadd.f32 %v156, %v157
        %159 = vst [vmem:[#allocation2] sm:$0xff] %v158
        %v160 = vld [vmem:[#allocation3] sm:$0xff]
        %v161 = vmax.f32 %v160, %v155
        %162 = vst [vmem:[#allocation3] sm:$0xff] %v161
        // Predicated region
        $region33: #{tpu_custom_call.1} parent=23 // pred_check
          %p163 = pneg %p149
        $region34: #{tpu_custom_call.1} parent=23 // pred_check_branch
          %165 = sbr.rel (%p163) target = $region36
        $region35: #{tpu_custom_call.1} parent=23 // pred_region
          %v166 = vld [vmem:[#allocation2] sm:$0xff]
          %v168 = vcombine.high %v166, %v166
          %vm170 = vcmask 1043456
          %v171 = vsel %vm170, %v166, 0.0
          %v172 = vrot.slane %v171, 4
          %v173 = vadd.f32 %v171, %v172
          %v174 = vrot.slane %v173, 2
          %v175 = vadd.f32 %v173, %v174
          %v176 = vrot.slane %v175, 1
          %v177 = vadd.f32 %v175, %v176
          %v178 = vsel %vm170, %v168, 0.0
          %v179 = vrot.slane %v178, 4
          %v180 = vadd.f32 %v178, %v179
          %v181 = vrot.slane %v180, 2
          %v182 = vadd.f32 %v180, %v181
          %v183 = vrot.slane %v182, 1
          %v184 = vadd.f32 %v182, %v183
          %v185 = vmul.f32 %v177, 0.25
          %v186 = vmul.f32 %v184, 0.25
          %v189 = vcombine.low %v185, %v186
          %v191 = vunpack.c.l.s4 1966171168
          %v192 = vunpack.c.0.s8 %v191
          %v193 = vlaneseq
          %v194 = vshrl.u32 %v193, 7
          %v195 = vsub.s32 %v192, %v194
          %v196 = vrot.slane %v189, %v195
          %v198 = vunpack.c.l.s4 1966171168
          %v199 = vunpack.c.0.s8 %v198
          %v200 = vlaneseq
          %v201 = vshrl.u32 %v200, 7
          %v202 = vsub.s32 %v199, %v201
          %v203 = vrot.slane %v196, %v202
          %v205 = vlaneseq
          %vm206 = vcmp.ge.s32.totalorder %v205, 0
          %vm207 = vcmp.lt.s32.totalorder %v205, 256
          %vm208 = vmand %vm206, %vm207
          %209 = vst.msk [vmem:[%s148] ss:$2 sm:$0x3] %vm208, %v203
          %v210 = vld [vmem:[#allocation3] sm:$0xff]
          %v212 = vcombine.high %v210, %v210
          %v214 = vsel %vm170, %v210, -inf
          %v215 = vrot.slane %v214, 4
          %v216 = vmax.f32 %v214, %v215
          %v217 = vrot.slane %v216, 2
          %v218 = vmax.f32 %v216, %v217
          %v219 = vrot.slane %v218, 1
          %v220 = vmax.f32 %v218, %v219
          %v221 = vsel %vm170, %v212, -inf
          %v222 = vrot.slane %v221, 4
          %v223 = vmax.f32 %v221, %v222
          %v224 = vrot.slane %v223, 2
          %v225 = vmax.f32 %v223, %v224
          %v226 = vrot.slane %v225, 1
          %v227 = vmax.f32 %v225, %v226
          %v230 = vcombine.low %v220, %v227
          %v232 = vunpack.c.l.s4 1966171168
          %v233 = vunpack.c.0.s8 %v232
          %v234 = vlaneseq
          %v235 = vshrl.u32 %v234, 7
          %v236 = vsub.s32 %v233, %v235
          %v237 = vrot.slane %v230, %v236
          %v239 = vunpack.c.l.s4 1966171168
          %v240 = vunpack.c.0.s8 %v239
          %v241 = vlaneseq
          %v242 = vshrl.u32 %v241, 7
          %v243 = vsub.s32 %v240, %v242
          %v244 = vrot.slane %v237, %v243
          %s246 = scalar_lea.vmem %s148, 1 [#allocation7]
          %247 = vst.msk [vmem:[%s246] ss:$2 sm:$0x3] %vm208, %v244
        $region36: #{tpu_custom_call.1} parent=23 // pred_fallthru
          _
        %s248 = sand.u32 %s66, 1
        %s249 = scalar_lea.sflag [#allocation6], %s248
        %s250 = sand.u32 %s66, 1
        %s251 = smul.addr %s250, 4
        %s252 = scalar_lea.vmem [#allocation7], %s251
        // Predicated region
        $region37: #{tpu_custom_call.1} parent=23 // pred_check
          %p253 = pneg %p76
        $region38: #{tpu_custom_call.1} parent=23 // pred_check_branch
          %255 = sbr.rel (%p253) target = $region40
        $region39: #{tpu_custom_call.1} parent=23 // pred_region
          %s257 = ssub.s32 64, 64
          %258 = vsyncadd %s249, %s257
          %s259 = smul.addr %s22, 2
          %s260 = smul.addr %s259, 32
          %s261 = scalar_lea.hbm %s1, %s260
          %s263 = sshll.u32 %s252, 4
          %s264 = int_to_ptr.vmem [resolvable:$true] %s263
          %266 = dma.vmem_to_hbm [thread:$0]  %s264, 64, %s261, %s249
        $region40: #{tpu_custom_call.1} parent=23 // pred_fallthru
          _
      $region24: #{tpu_custom_call.1} parent=5 // pred_fallthru
        _
      %p267 = scmp.le.s32.totalorder 2, %s13
      // Predicated region
      $region41: #{tpu_custom_call.1} parent=5 // pred_check
        %p268 = pneg %p267
      $region42: #{tpu_custom_call.1} parent=5 // pred_check_branch
        %270 = sbr.rel (%p268) target = $region44
      $region43: #{tpu_custom_call.1} parent=5 // pred_region
        %s271 = ssub.s32 %s13, 2
        // Predicated region
        $region45: #{tpu_custom_call.1} parent=43 // pred_check
          %p272 = pneg %p82
        $region46: #{tpu_custom_call.1} parent=43 // pred_check_branch
          %274 = sbr.rel (%p272) target = $region48
        $region47: #{tpu_custom_call.1} parent=43 // pred_region
          %s275 = sand.u32 %s67, 1
          %s276 = scalar_lea.sflag [#allocation6], %s275
          %s277 = sand.u32 %s67, 1
          %s278 = smul.addr %s277, 4
          %s279 = scalar_lea.vmem [#allocation7], %s278
          %280 = dma.done %s276, 64
        $region48: #{tpu_custom_call.1} parent=43 // pred_fallthru
          _
      $region44: #{tpu_custom_call.1} parent=5 // pred_fallthru
        _
    $region6: #{tpu_custom_call.1} parent=1 // loop_footer
      %s17 = sadd.s32 1, %s13
    $region7: #{tpu_custom_call.1} parent=1 // loop_footer_branch
      %12 = sbr.rel target = $region3
    $region8: #{tpu_custom_call.1} parent=1 // loop_exit
      _
    %281 = vsyncpa [#allocation5], 1
    %s282 = scalar_lea.sflag [#allocation5], 1
    %283 = vsyncpa %s282, 1
    %284 = vsyncpa [#allocation6], 1
    %s285 = scalar_lea.sflag [#allocation6], 1
    %286 = vsyncpa %s285, 1

</llo_original>
